<compile_context>
chip_gen: v6e
topology: v6e:2x2x1
jax: 0.10.0
libtpu: 0.0.40
codegen_flags: <defaults>
</compile_context>

<pallas_src>
import functools

import jax
import jax.numpy as jnp
from jax import lax
from jax.experimental import pallas as pl
from jax.experimental.pallas import tpu as pltpu


# -----------------------------------------------------------------------------
# Kernel A: time-parallel affine  y = x @ W + b
# Used for (1) the hoisted GRU input projection and (2) the output projection.
# -----------------------------------------------------------------------------
def affine_kernel(x_ref, w_ref, b_ref, o_ref):
    # Cast activations to the weight dtype (bf16 path) but accumulate in f32.
    x = x_ref[...].astype(w_ref.dtype)
    acc = jnp.dot(x, w_ref[...], preferred_element_type=jnp.float32)
    o_ref[...] = (acc + b_ref[...].astype(jnp.float32)).astype(o_ref.dtype)


def _pick_tile(dim, pref, align):
    """Largest tile <= pref that divides dim and is a multiple of `align`;
    falls back to the full dimension (always a legal block shape)."""
    if dim <= pref:
        return dim
    t = (pref // align) * align
    while t >= align:
        if dim % t == 0:
            return t
        t -= align
    return dim


def affine(x, w, b, *, out_dtype=jnp.float32, tm_pref=256, tn_pref=512):
    """y[M, N] = x[M, K] @ w[K, N] + b[1, N], tiled over (M, N), both parallel."""
    M, K = x.shape
    K2, N = w.shape
    assert K == K2 and b.shape == (1, N)
    tm = _pick_tile(M, tm_pref, 8)     # sublane-aligned M tiles
    tn = _pick_tile(N, tn_pref, 128)   # lane-dense N tiles (unmasked vst)
    grid = (M // tm, N // tn)
    return pl.pallas_call(
        affine_kernel,
        out_shape=jax.ShapeDtypeStruct((M, N), out_dtype),
        grid_spec=pltpu.PrefetchScalarGridSpec(
            num_scalar_prefetch=0,
            grid=grid,
            in_specs=[
                pl.BlockSpec((tm, K), lambda i, j: (i, 0)),
                pl.BlockSpec((K, tn), lambda i, j: (0, j)),
                pl.BlockSpec((1, tn), lambda i, j: (0, j)),
            ],
            out_specs=pl.BlockSpec((tm, tn), lambda i, j: (i, j)),
        ),
        compiler_params=pltpu.CompilerParams(
            dimension_semantics=("parallel", "parallel"),
        ),
    )(x, w, b)


# -----------------------------------------------------------------------------
# Kernel B: serial GRU recurrence over time, Tc steps per grid iteration.
# Only the h @ W_hh matmul + gate math remain on the serial critical path.
# -----------------------------------------------------------------------------
def gru_recurrence_kernel(gi_ref, h0_ref, whh_ref, bhn_ref, hs_ref, h_scratch,
                          *, hid_size, chunk):
    H = hid_size

    @pl.when(pl.program_id(0) == 0)
    def _():
        h_scratch[...] = h0_ref[...]

    whh = whh_ref[...]
    bhn = bhn_ref[...].astype(jnp.float32)   # (1, H) n-gate hidden bias

    def step(tl, h):
        gi = gi_ref[tl]                                   # (B, 3H), f32, bias-folded
        gh = jnp.dot(h.astype(whh.dtype), whh,
                     preferred_element_type=jnp.float32)  # (B, 3H)
        r = jax.nn.sigmoid(gi[:, 0:H] + gh[:, 0:H])
        z = jax.nn.sigmoid(gi[:, H:2 * H] + gh[:, H:2 * H])
        n = jnp.tanh(gi[:, 2 * H:3 * H] + r * (gh[:, 2 * H:3 * H] + bhn))
        h_new = (1.0 - z) * n + z * h
        hs_ref[tl] = h_new.astype(hs_ref.dtype)
        return h_new

    # Unrolled short fixed-trip loop over the time chunk (LLO visibility).
    h_last = lax.fori_loop(0, chunk, step, h_scratch[...], unroll=True)
    h_scratch[...] = h_last


# -----------------------------------------------------------------------------
# Wrapper: Embedding -> (hoisted input proj) -> GRU recurrence -> output proj.
# -----------------------------------------------------------------------------
def rnn_decoder_forward(z, sentences, params, *, time_chunk=16):
    """z: (B, H) initial hidden; sentences: (B, T) int32 token ids.
    Returns logits (B, T, V), matching the PyTorch module (batch_first)."""
    emb_table = params["emb_table"]        # (V, E)
    w_ih = params["w_ih"]                  # (E, 3H)
    w_hh = params["w_hh"]                  # (H, 3H)
    b_ih = params["b_ih"].astype(jnp.float32)   # (1, 3H)
    b_hh = params["b_hh"].astype(jnp.float32)   # (1, 3H)
    w_out = params["w_out"]                # (H, V)
    b_out = params["b_out"].astype(jnp.float32)  # (1, V)

    B, T = sentences.shape
    E = emb_table.shape[1]
    H = z.shape[1]
    V = w_out.shape[1]

    # Embedding gather directly time-major (no separate transpose pass).
    # Dropword with p=0 is the identity.
    embs_t = emb_table[sentences.T]                       # (T, B, E)

    # ---- hoisted input projection (time-parallel Pallas affine) ------------
    # Fold b_ih and the r/z part of b_hh here; keep only the n-gate hidden
    # bias for the recurrence (it must be multiplied by r).
    b_comb = jnp.concatenate(
        [b_ih[:, :2 * H] + b_hh[:, :2 * H], b_ih[:, 2 * H:]], axis=1)  # (1, 3H)
    gi = affine(embs_t.reshape(T * B, E), w_ih, b_comb, out_dtype=jnp.float32)
    gi = gi.reshape(T, B, 3 * H)

    # ---- serial GRU recurrence (Pallas, hidden state in VMEM scratch) ------
    tc = max(1, min(time_chunk, T))
    while T % tc:                                         # largest divisor <= time_chunk
        tc -= 1
    b_hn = b_hh[:, 2 * H:]                                # (1, H)
    kernel = functools.partial(gru_recurrence_kernel, hid_size=H, chunk=tc)
    hs = pl.pallas_call(
        kernel,
        out_shape=jax.ShapeDtypeStruct((T, B, H), jnp.float32),
        grid_spec=pltpu.PrefetchScalarGridSpec(
            num_scalar_prefetch=0,
            grid=(T // tc,),
            in_specs=[
                pl.BlockSpec((tc, B, 3 * H), lambda i: (i, 0, 0)),  # gi chunk
                pl.BlockSpec((B, H), lambda i: (0, 0)),             # h0
                pl.BlockSpec((H, 3 * H), lambda i: (0, 0)),         # W_hh
                pl.BlockSpec((1, H), lambda i: (0, 0)),             # b_hn
            ],
            out_specs=pl.BlockSpec((tc, B, H), lambda i: (i, 0, 0)),
            scratch_shapes=[pltpu.VMEM((B, H), jnp.float32)],
        ),
        compiler_params=pltpu.CompilerParams(
            dimension_semantics=("arbitrary",),   # inherently serial in time
        ),
    )(gi, z.astype(jnp.float32), w_hh, b_hn)

    # ---- output projection (time-parallel Pallas affine, M = B*T) ----------
    # Transpose the *small* hidden-state array (H << V) so the large logits
    # array is produced directly in batch_first layout (no logits transpose).
    hs_bf = jnp.transpose(hs, (1, 0, 2)).reshape(B * T, H)
    logits = affine(hs_bf, w_out, b_out, out_dtype=jnp.float32)
    return logits.reshape(B, T, V)


# -----------------------------------------------------------------------------
# Pure-JAX reference of the PyTorch forward (for correctness checking).
# -----------------------------------------------------------------------------
def rnn_decoder_reference(z, sentences, params):
    emb_table = params["emb_table"].astype(jnp.float32)
    H = z.shape[1]
    w_ih = params["w_ih"].astype(jnp.float32)
    w_hh = params["w_hh"].astype(jnp.float32)
    b_ih = params["b_ih"].astype(jnp.float32)
    b_hh = params["b_hh"].astype(jnp.float32)
    w_out = params["w_out"].astype(jnp.float32)
    b_out = params["b_out"].astype(jnp.float32)

    embs = emb_table[sentences]            # (B, T, E)

    def step(h, x_t):
        gi = x_t @ w_ih + b_ih
        gh = h @ w_hh + b_hh
        i_r, i_z, i_n = gi[:, :H], gi[:, H:2 * H], gi[:, 2 * H:]
        h_r, h_z, h_n = gh[:, :H], gh[:, H:2 * H], gh[:, 2 * H:]
        r = jax.nn.sigmoid(i_r + h_r)
        zt = jax.nn.sigmoid(i_z + h_z)
        n = jnp.tanh(i_n + r * h_n)
        h_new = (1.0 - zt) * n + zt * h
        return h_new, h_new

    xs = jnp.transpose(embs, (1, 0, 2))    # (T, B, E)
    _, hs = jax.lax.scan(step, z, xs)      # (T, B, H)
    logits = hs @ w_out + b_out
    return jnp.transpose(logits, (1, 0, 2))


def init_params(key, vocab_size, emb_size, hid_size, pad_idx=0):
    ks = jax.random.split(key, 7)
    scale = 1.0 / jnp.sqrt(hid_size)
    emb_table = jax.random.normal(ks[0], (vocab_size, emb_size), jnp.float32)
    emb_table = emb_table.at[pad_idx].set(0.0)  # padding_idx row
    params = {
        "emb_table": emb_table,
        # PyTorch stores (3H, E)/(3H, H); we keep the right-multiply transpose.
        "w_ih": jax.random.uniform(ks[1], (emb_size, 3 * hid_size), jnp.float32,
                                   -scale, scale),
        "w_hh": jax.random.uniform(ks[2], (hid_size, 3 * hid_size), jnp.float32,
                                   -scale, scale),
        "b_ih": jax.random.uniform(ks[3], (1, 3 * hid_size), jnp.float32,
                                   -scale, scale),
        "b_hh": jax.random.uniform(ks[4], (1, 3 * hid_size), jnp.float32,
                                   -scale, scale),
        "w_out": jax.random.uniform(ks[5], (hid_size, vocab_size), jnp.float32,
                                    -scale, scale),
        "b_out": jax.random.uniform(ks[6], (1, vocab_size), jnp.float32,
                                    -scale, scale),
    }
    return params


if __name__ == "__main__":
    B, T, E, H, V = 2, 8, 16, 32, 32   # batch, seq, emb_size, hid_size, |vocab|
    PAD = 0                            # vocab.stoi['<pad>']

    key = jax.random.PRNGKey(0)
    k_param, k_z, k_sent = jax.random.split(key, 3)

    params = init_params(k_param, V, E, H, pad_idx=PAD)
    z = jax.random.normal(k_z, (B, H), jnp.float32)
    sentences = jax.random.randint(k_sent, (B, T), 0, V, dtype=jnp.int32)

    # f32 weights: exact check against the pure-JAX reference.
    logits = jax.block_until_ready(
        rnn_decoder_forward(z, sentences, params, time_chunk=4))
    ref = jax.block_until_ready(rnn_decoder_reference(z, sentences, params))
    assert logits.shape == (B, T, V), logits.shape
    assert jnp.allclose(logits, ref, atol=1e-4, rtol=1e-4), \
        float(jnp.max(jnp.abs(logits - ref)))

    # bf16 weights (MXU-native path), f32 accumulation / gates: loose check.
    params_bf16 = dict(params)
    for name in ("emb_table", "w_ih", "w_hh", "w_out"):
        params_bf16[name] = params[name].astype(jnp.bfloat16)
    logits_bf16 = jax.block_until_ready(
        rnn_decoder_forward(z, sentences, params_bf16, time_chunk=4))
    assert logits_bf16.shape == (B, T, V)
    assert bool(jnp.all(jnp.isfinite(logits_bf16)))
    assert float(jnp.max(jnp.abs(logits_bf16 - ref))) < 0.5

    print("KERNEL_OK")
</pallas_src>

<mosaic_0001>
module attributes {stable_mosaic.version = 11 : i64} {
  func.func @affine_kernel(%arg0: i32, %arg1: i32, %arg2: memref<16x16xf32, #tpu.memory_space<vmem>>, %arg3: memref<16x96xf32, #tpu.memory_space<vmem>>, %arg4: memref<1x96xf32, #tpu.memory_space<vmem>>, %arg5: memref<16x96xf32, #tpu.memory_space<vmem>>) attributes {dimension_semantics = [#tpu.dimension_semantics<parallel>, #tpu.dimension_semantics<parallel>], iteration_bounds = array<i64: 1, 1>, scalar_prefetch = 0 : i64, scratch_operands = 0 : i64, tpu.core_type = #tpu.core_type<tc>, window_params = [{transform_indices = @transform_0, window_bounds = array<i64: 16, 16>}, {transform_indices = @transform_1, window_bounds = array<i64: 16, 96>}, {transform_indices = @transform_2, window_bounds = array<i64: 1, 96>}, {transform_indices = @transform_3, window_bounds = array<i64: 16, 96>}]} {
    %c0 = arith.constant 0 : index
    %c0_0 = arith.constant 0 : index
    %0 = vector.load %arg2[%c0, %c0_0] : memref<16x16xf32, #tpu.memory_space<vmem>>, vector<16x16xf32>
    %c0_1 = arith.constant 0 : index
    %c0_2 = arith.constant 0 : index
    %1 = vector.load %arg3[%c0_1, %c0_2] : memref<16x96xf32, #tpu.memory_space<vmem>>, vector<16x96xf32>
    %cst = arith.constant dense<0.000000e+00> : vector<16x96xf32>
    %2 = tpu.matmul %0, %1, %cst {dimension_numbers = #tpu.dot_dimension_numbers<[1], [0], [0], [1], [0, 0, 1, 1], [], []>} : vector<16x16xf32>, vector<16x96xf32>, vector<16x96xf32> -> vector<16x96xf32>
    %c0_3 = arith.constant 0 : index
    %c0_4 = arith.constant 0 : index
    %3 = vector.load %arg4[%c0_3, %c0_4] : memref<1x96xf32, #tpu.memory_space<vmem>>, vector<1x96xf32>
    %4 = vector.broadcast %3 : vector<1x96xf32> to vector<16x96xf32>
    %5 = arith.addf %2, %4 : vector<16x96xf32>
    %c0_5 = arith.constant 0 : index
    %c0_6 = arith.constant 0 : index
    %6 = vector.load %arg5[%c0_5, %c0_6] : memref<16x96xf32, #tpu.memory_space<vmem>>, vector<16x96xf32>
    tpu.vector_store %arg5[%c0_5, %c0_6], %5 {strides = array<i32>} : memref<16x96xf32, #tpu.memory_space<vmem>>, vector<16x96xf32>,
    return
  }
  func.func @transform_0(%arg0: i32, %arg1: i32) -> (i32, i32) {
    %c0_i32 = arith.constant 0 : i32
    %c0_i32_0 = arith.constant 0 : i32
    return %arg0, %c0_i32 : i32, i32
  }
  func.func @transform_1(%arg0: i32, %arg1: i32) -> (i32, i32) {
    %c0_i32 = arith.constant 0 : i32
    %c0_i32_0 = arith.constant 0 : i32
    return %c0_i32, %arg1 : i32, i32
  }
  func.func @transform_2(%arg0: i32, %arg1: i32) -> (i32, i32) {
    %c0_i32 = arith.constant 0 : i32
    %c0_i32_0 = arith.constant 0 : i32
    return %c0_i32, %arg1 : i32, i32
  }
  func.func @transform_3(%arg0: i32, %arg1: i32) -> (i32, i32) {
    %c0_i32 = arith.constant 0 : i32
    return %arg0, %arg1 : i32, i32
  }
}

</mosaic_0001>

<llo_original>
// kernel: tpu_custom_call.1
$region0: #{tpu_custom_call.1}
  #allocation0 [shape = 'u32[]', space=smem, size = 0x4, offset = 0x4, fixed_abs, tag = 'smem constant byte address 0x4 - core index']
  #allocation1 [shape = 'u32[144,128]{1,0:T(1,128)}', space=vmem, size = 0x12000, scoped, tag = 'internal scratch']
  %s0 = inlined_call_operand.hbm [shape: f32[16,16], index: 0, kind: input, shape index: {}]
  %s1 = inlined_call_operand.hbm [shape: f32[16,96], index: 1, kind: input, shape index: {}]
  %s2 = inlined_call_operand.vmem [shape: f32[1,96], index: 2, kind: input, shape index: {}]
  %s3 = inlined_call_operand.hbm [shape: f32[16,96], index: 3, kind: output, shape index: {}]
  %s4 = sld [smem:[#allocation0]]
  $region30: #{tpu_custom_call.1} parent=0
    _
  %s6 = ssub.s32 1, %s4
  %s7 = scalar_select 0, %s6, %s4
  $region1: #{tpu_custom_call.1} parent=0
    #allocation2 [shape = 'u8[8192]{0}', space=vmem, size = 0x2000, scoped, tag = 'input window, operand 0, single buffered']
    #allocation3 [shape = 's32[1]{0}', space=sflag, size = 0x4, scoped, tag = 'scoped memory for tpu_custom_call.1']
    #allocation4 [shape = 's32[1]{0}', space=sflag, size = 0x4, scoped, tag = 'scoped memory for tpu_custom_call.1']
    #allocation5 [shape = 'u8[8192]{0}', space=vmem, size = 0x2000, scoped, tag = 'input window, operand 1, single buffered']
    #allocation6 [shape = 's32[1]{0}', space=sflag, size = 0x4, scoped, tag = 'scoped memory for tpu_custom_call.1']
    #allocation7 [shape = 'u8[8192]{0}', space=vmem, size = 0x2000, scoped, tag = 'output window, operand 0, single buffered']
    %8 = vsyncpa [#allocation3], 0
    %9 = vsyncpa [#allocation6], 0
    %10 = vsyncpa [#allocation4], 0
    // Predicated region
    $region2: #{tpu_custom_call.1} parent=1 // pred_check
      _
    $region3: #{tpu_custom_call.1} parent=1 // pred_check_branch
      %12 = sbr.rel (0) target = $region5
    $region4: #{tpu_custom_call.1} parent=1 // pred_region
      %s14 = ssub.s32 256, 256
      %15 = vsyncadd [#allocation3], %s14
      %s16 = sshll.u32 [#allocation2], 4
      %s17 = int_to_ptr.vmem [resolvable:$true] %s16
      %22 = dma.hbm_to_vmem [thread:$0]  %s0, 256, %s17, [#allocation3], 128, 128, 8
    $region5: #{tpu_custom_call.1} parent=1 // pred_fallthru
      _
    // Predicated region
    $region6: #{tpu_custom_call.1} parent=1 // pred_check
      _
    $region7: #{tpu_custom_call.1} parent=1 // pred_check_branch
      %24 = sbr.rel (0) target = $region9
    $region8: #{tpu_custom_call.1} parent=1 // pred_region
      %s26 = ssub.s32 256, 256
      %27 = vsyncadd [#allocation6], %s26
      %s28 = sshll.u32 [#allocation5], 4
      %s29 = int_to_ptr.vmem [resolvable:$true] %s28
      %34 = dma.hbm_to_vmem [thread:$0]  %s1, 256, %s29, [#allocation6], 128, 128, 8
    $region9: #{tpu_custom_call.1} parent=1 // pred_fallthru
      _
    // Predicated region
    $region10: #{tpu_custom_call.1} parent=1 // pred_check
      _
    $region11: #{tpu_custom_call.1} parent=1 // pred_check_branch
      %36 = sbr.rel (0) target = $region13
    $region12: #{tpu_custom_call.1} parent=1 // pred_region
      _
    $region13: #{tpu_custom_call.1} parent=1 // pred_fallthru
      _
    // Predicated region
    $region14: #{tpu_custom_call.1} parent=1 // pred_check
      _
    $region15: #{tpu_custom_call.1} parent=1 // pred_check_branch
      %38 = sbr.rel (0) target = $region17
    $region16: #{tpu_custom_call.1} parent=1 // pred_region
      %39 = dma.done [#allocation3], 256
    $region17: #{tpu_custom_call.1} parent=1 // pred_fallthru
      _
    // Predicated region
    $region18: #{tpu_custom_call.1} parent=1 // pred_check
      _
    $region19: #{tpu_custom_call.1} parent=1 // pred_check_branch
      %41 = sbr.rel (0) target = $region21
    $region20: #{tpu_custom_call.1} parent=1 // pred_region
      %42 = dma.done [#allocation6], 256
    $region21: #{tpu_custom_call.1} parent=1 // pred_fallthru
      _
    %v43 = vld [vmem:[#allocation2] sm:$0xff]
    %v44 = vld [vmem:[#allocation2 + $0x8] sm:$0xff]
    %v45 = vld [vmem:[#allocation5] sm:$0xff]
    %v46 = vld [vmem:[#allocation5 + $0x8] sm:$0xff]
    %v47 = vld [vmem:[%s2] sm:$0x1]
    %v49 = vlaneseq
    %v50 = vshrl.u32 %v49, 7
    %v51 = vsub.s32 0, %v50
    %v52 = vrot.slane %v47, %v51
    %vm54 = vcmask 130048
    %v56 = vsel %vm54, %v43, 0
    %v59 = vsel %vm54, %v44, 0
    %61 = vmatprep.subr.mxu0 0.0
    %62 = vmatpush1.msra.mxu0 0.0
    %63 = vmatprep.subr.mxu0 0.0
    %64 = vmatpush1.msra.mxu0 0.0
    %65 = vmatprep.subr.mxu0 0.0
    %66 = vmatpush1.msra.mxu0 0.0
    %67 = vmatprep.subr.mxu0 0.0
    %68 = vmatpush1.msra.mxu0 0.0
    %69 = vmatprep.subr.mxu0 0.0
    %70 = vmatpush1.msra.mxu0 0.0
    %71 = vmatprep.subr.mxu0 0.0
    %72 = vmatpush1.msra.mxu0 0.0
    %73 = vmatprep.subr.mxu0 0.0
    %74 = vmatpush1.msra.mxu0 0.0
    %75 = vmatprep.subr.mxu0 0.0
    %76 = vmatpush1.msra.mxu0 0.0
    %77 = vmatprep.subr.mxu0 0.0
    %78 = vmatpush1.msra.mxu0 0.0
    %79 = vmatprep.subr.mxu0 0.0
    %80 = vmatpush1.msra.mxu0 0.0
    %81 = vmatprep.subr.mxu0 0.0
    %82 = vmatpush1.msra.mxu0 0.0
    %83 = vmatprep.subr.mxu0 0.0
    %84 = vmatpush1.msra.mxu0 0.0
    %85 = vmatprep.subr.mxu0 0.0
    %86 = vmatpush1.msra.mxu0 0.0
    %87 = vmatprep.subr.mxu0 0.0
    %88 = vmatpush1.msra.mxu0 0.0
    %89 = vmatprep.subr.mxu0 0.0
    %90 = vmatpush1.msra.mxu0 %v46
    %91 = vmatprep.subr.mxu0 0.0
    %92 = vmatpush1.msra.mxu0 %v45
    %93 = vmatprep.subr.mxu0 0.0
    %94 = vmatpush2.msra.mxu0 0.0
    %95 = vmatprep.subr.mxu0 0.0
    %96 = vmatpush2.msra.mxu0 0.0
    %97 = vmatprep.subr.mxu0 0.0
    %98 = vmatpush2.msra.mxu0 0.0
    %99 = vmatprep.subr.mxu0 0.0
    %100 = vmatpush2.msra.mxu0 0.0
    %101 = vmatprep.subr.mxu0 0.0
    %102 = vmatpush2.msra.mxu0 0.0
    %103 = vmatprep.subr.mxu0 0.0
    %104 = vmatpush2.msra.mxu0 0.0
    %105 = vmatprep.subr.mxu0 0.0
    %106 = vmatpush2.msra.mxu0 0.0
    %107 = vmatprep.subr.mxu0 0.0
    %108 = vmatpush2.msra.mxu0 0.0
    %109 = vmatprep.subr.mxu0 0.0
    %110 = vmatpush2.msra.mxu0 0.0
    %111 = vmatprep.subr.mxu0 0.0
    %112 = vmatpush2.msra.mxu0 0.0
    %113 = vmatprep.subr.mxu0 0.0
    %114 = vmatpush2.msra.mxu0 0.0
    %115 = vmatprep.subr.mxu0 0.0
    %116 = vmatpush2.msra.mxu0 0.0
    %117 = vmatprep.subr.mxu0 0.0
    %118 = vmatpush2.msra.mxu0 0.0
    %119 = vmatprep.subr.mxu0 0.0
    %120 = vmatpush2.msra.mxu0 0.0
    %121 = vmatprep.subr.mxu0 0.0
    %122 = vmatpush2.msra.mxu0 0.0
    %123 = vmatprep.subr.mxu0 0.0
    %124 = vmatpush2.msra.mxu0 0.0
    %125 = vmatprep.mubr.f32.mxu0 0.0
    %126 = vmatmul.mubr.f32.gmra.mxu0 %v56
    %v127 = vpop.f32.mrf.mxu0
    %v128 = vadd.f32 %v52, %v127
    %v129 = vpop.f32.mrf.mxu0
    %130 = vmatprep.mubr.f32.mxu0 0.0
    %131 = vmatmul.mubr.f32.gmra.mxu0 %v59
    %v132 = vpop.f32.mrf.mxu0
    %v133 = vadd.f32 %v52, %v132
    %v134 = vpop.f32.mrf.mxu0
    %135 = vdwg.mxu0
    %vm136 = vcmask 785408
    %137 = vst.msk [vmem:[#allocation7] sm:$0xff] %vm136, %v128
    %138 = vst.msk [vmem:[#allocation7 + $0x8] sm:$0xff] %vm136, %v133
    // Predicated region
    $region22: #{tpu_custom_call.1} parent=1 // pred_check
      _
    $region23: #{tpu_custom_call.1} parent=1 // pred_check_branch
      %140 = sbr.rel (0) target = $region25
    $region24: #{tpu_custom_call.1} parent=1 // pred_region
      %s142 = ssub.s32 256, 256
      %143 = vsyncadd [#allocation4], %s142
      %s144 = sshll.u32 [#allocation7], 4
      %s145 = int_to_ptr.vmem [resolvable:$true] %s144
      %150 = dma.vmem_to_hbm [thread:$0]  %s145, 256, %s3, [#allocation4], 128, 128, 8
    $region25: #{tpu_custom_call.1} parent=1 // pred_fallthru
      _
    // Predicated region
    $region26: #{tpu_custom_call.1} parent=1 // pred_check
      _
    $region27: #{tpu_custom_call.1} parent=1 // pred_check_branch
      %152 = sbr.rel (0) target = $region29
    $region28: #{tpu_custom_call.1} parent=1 // pred_region
      %153 = dma.done [#allocation4], 256
    $region29: #{tpu_custom_call.1} parent=1 // pred_fallthru
      _
    %154 = vsyncpa [#allocation3], 1
    %155 = vsyncpa [#allocation6], 1
    %156 = vsyncpa [#allocation4], 1

</llo_original>
